<compile_context>
chip_gen: v6e
topology: v6e:2x2x1
jax: 0.10.0
libtpu: 0.0.40
codegen_flags: <defaults>
</compile_context>

<pallas_src>
import functools

import jax
import jax.numpy as jnp
from jax.experimental import pallas as pl
from jax.experimental.pallas import tpu as pltpu

LANES = 128
MAX_BLOCK_ROWS = 2048   # (2048,128) f32 tile = 1 MiB
NUM_SPLITS = 2          # leading "parallel" grid axis (both TCs on v7x)


def _dice_loss_kernel(x_ref, t_ref, num_out_ref, tot_out_ref, num_acc, tot_acc,
                      *, n_valid, ignore_target, block_rows, blocks_per_split):
    i = pl.program_id(0)   # split (parallel)
    j = pl.program_id(1)   # block within split (sequential reduction axis)

    @pl.when(j == 0)
    def _():
        num_acc[...] = jnp.zeros_like(num_acc)
        tot_acc[...] = jnp.zeros_like(tot_acc)

    x = x_ref[...].astype(jnp.float32)
    t = t_ref[...].astype(jnp.float32)
    sig = jax.nn.sigmoid(x)                              # torch.sigmoid

    # Global element index of every lane in this *logical* block; anything at
    # or past n_valid is lane padding / out-of-range garbage -> masked out.
    blk = i * blocks_per_split + j                       # unclamped block id
    row_ids = jax.lax.broadcasted_iota(jnp.int32, (block_rows, LANES), 0)
    lane_ids = jax.lax.broadcasted_iota(jnp.int32, (block_rows, LANES), 1)
    elem = (blk * block_rows + row_ids) * LANES + lane_ids
    valid = jnp.logical_and(elem < n_valid,
                            t != jnp.float32(ignore_target))  # ignore mask

    # jnp.where (select), not multiply: padded VMEM regions may hold NaNs.
    num_acc[...] += jnp.where(valid, jnp.minimum(sig, t), 0.0)
    tot_acc[...] += jnp.where(valid, sig + t, 0.0)       # min+max == sig+t

    @pl.when(j == pl.num_programs(1) - 1)
    def _():
        num_out_ref[...] = jnp.sum(num_acc[...], axis=0, keepdims=True)
        tot_out_ref[...] = jnp.sum(tot_acc[...], axis=0, keepdims=True)


def dice_loss(logits, target, ignore_target=-1, *, max_block_rows=MAX_BLOCK_ROWS):
    """Pallas TPU implementation of DiceLoss.forward.

    logits: any-shape array of logits (any float dtype; used as input.view(-1))
    target: any-shape array with values in {0, 1} or ignore_target (any
            int/float dtype).
    returns: scalar float32 loss
    """
    x = jnp.ravel(logits)
    t = jnp.ravel(target)
    n = int(x.shape[0])

    # Only pad to the next 128-lane boundary (needed for the (rows, 128)
    # reshape); pad values are irrelevant because the kernel masks by index.
    # TODO(synk): accept the raw 1-D ragged vector (manual-DMA path) to avoid
    # even this small pad copy when n % 128 != 0.
    rows = -(-n // LANES)
    n_pad = rows * LANES
    if n_pad != n:
        x = jnp.pad(x, (0, n_pad - n))
        t = jnp.pad(t, (0, n_pad - n))
    x2 = x.reshape(rows, LANES)
    t2 = t.reshape(rows, LANES)

    if rows <= max_block_rows:
        block_rows = rows                       # single full-extent block
    else:
        block_rows = max(8, max_block_rows - max_block_rows % 8)
    total_blocks = -(-rows // block_rows)
    num_splits = NUM_SPLITS if total_blocks >= NUM_SPLITS else 1
    blocks_per_split = -(-total_blocks // num_splits)

    def in_index_map(i, j):
        # Clamp fully out-of-range blocks onto the last real block; their
        # contribution is zeroed by the in-kernel index mask.
        return (jnp.minimum(i * blocks_per_split + j, total_blocks - 1), 0)

    kernel = functools.partial(
        _dice_loss_kernel,
        n_valid=n,
        ignore_target=float(ignore_target),
        block_rows=block_rows,
        blocks_per_split=blocks_per_split,
    )

    num_part, tot_part = pl.pallas_call(
        kernel,
        out_shape=(
            jax.ShapeDtypeStruct((num_splits, LANES), jnp.float32),
            jax.ShapeDtypeStruct((num_splits, LANES), jnp.float32),
        ),
        grid_spec=pltpu.PrefetchScalarGridSpec(
            num_scalar_prefetch=0,
            grid=(num_splits, blocks_per_split),
            in_specs=[
                pl.BlockSpec((block_rows, LANES), in_index_map),
                pl.BlockSpec((block_rows, LANES), in_index_map),
            ],
            out_specs=[
                pl.BlockSpec((1, LANES), lambda i, j: (i, 0)),
                pl.BlockSpec((1, LANES), lambda i, j: (i, 0)),
            ],
            scratch_shapes=[
                pltpu.VMEM((block_rows, LANES), jnp.float32),  # sum(min*mask)
                pltpu.VMEM((block_rows, LANES), jnp.float32),  # sum((sig+t)*mask)
            ],
        ),
        compiler_params=pltpu.CompilerParams(
            dimension_semantics=("parallel", "arbitrary"),
        ),
    )(x2, t2)

    # Tiny JAX epilogue: lane/split reduction + clamp + divide.
    num = jnp.sum(num_part)
    tot = jnp.sum(tot_part)
    den = jnp.maximum(tot - num, jnp.float32(1.0))       # torch.clamp(min=1.0)
    return jnp.float32(1.0) - num / den


def dice_loss_ref(logits, target, ignore_target=-1):
    x = jax.nn.sigmoid(jnp.ravel(logits).astype(jnp.float32))
    t = jnp.ravel(target).astype(jnp.float32)
    mask = (t != ignore_target).astype(jnp.float32)
    num = jnp.sum(jnp.minimum(x, t) * mask)
    den = jnp.maximum(jnp.sum(jnp.maximum(x, t) * mask), 1.0)
    return 1.0 - num / den


if __name__ == "__main__":
    key = jax.random.PRNGKey(0)
    k1, k2, k3 = jax.random.split(key, 3)

    # Case 1: narrow dtypes (bf16 logits, int8 targets), single full-extent
    # block, n not a multiple of 128 -> exercises lane padding + tail mask.
    N1 = 2000
    logits1 = jax.random.normal(k1, (N1,), dtype=jnp.float32).astype(jnp.bfloat16)
    tgt1 = jax.random.bernoulli(k2, p=0.4, shape=(N1,)).astype(jnp.int8)
    ign1 = jax.random.bernoulli(k3, p=0.1, shape=(N1,))
    tgt1 = jnp.where(ign1, jnp.int8(-1), tgt1)
    out1 = jax.block_until_ready(dice_loss(logits1, tgt1, ignore_target=-1))
    ref1 = dice_loss_ref(logits1, tgt1, ignore_target=-1)
    assert jnp.allclose(out1, ref1, atol=1e-5, rtol=1e-4), (out1, ref1)

    # Case 2: f32 path with a tiny block to exercise the 2-D (parallel split,
    # sequential reduction) grid, the partial last block and the clamp path
    # (3 blocks over 2 splits).
    N2 = 2560
    logits2 = jax.random.normal(k1, (N2,), dtype=jnp.float32)
    tgt2 = jax.random.bernoulli(k2, p=0.35, shape=(N2,)).astype(jnp.float32)
    ign2 = jax.random.bernoulli(k3, p=0.15, shape=(N2,))
    tgt2 = jnp.where(ign2, jnp.float32(-1.0), tgt2)
    out2 = jax.block_until_ready(
        dice_loss(logits2, tgt2, ignore_target=-1, max_block_rows=8))
    ref2 = dice_loss_ref(logits2, tgt2, ignore_target=-1)
    assert jnp.allclose(out2, ref2, atol=1e-5, rtol=1e-4), (out2, ref2)

    print("KERNEL_OK")
</pallas_src>

<mosaic_0001>
module attributes {stable_mosaic.version = 11 : i64} {
  func.func @_dice_loss_kernel(%arg0: i32, %arg1: i32, %arg2: memref<16x128xbf16, #tpu.memory_space<vmem>>, %arg3: memref<16x128xi8, #tpu.memory_space<vmem>>, %arg4: memref<1x128xf32, #tpu.memory_space<vmem>>, %arg5: memref<1x128xf32, #tpu.memory_space<vmem>>, %arg6: memref<16x128xf32, #tpu.memory_space<vmem>>, %arg7: memref<16x128xf32, #tpu.memory_space<vmem>>) attributes {dimension_semantics = [#tpu.dimension_semantics<parallel>, #tpu.dimension_semantics<arbitrary>], iteration_bounds = array<i64: 1, 1>, scalar_prefetch = 0 : i64, scratch_operands = 2 : i64, tpu.core_type = #tpu.core_type<tc>, window_params = [{transform_indices = @transform_0, window_bounds = array<i64: 16, 128>}, {transform_indices = @transform_1, window_bounds = array<i64: 16, 128>}, {transform_indices = @transform_2, window_bounds = array<i64: 1, 128>}, {transform_indices = @transform_3, window_bounds = array<i64: 1, 128>}]} {
    %c0_i32 = arith.constant 0 : i32
    %0 = arith.cmpi eq, %arg1, %c0_i32 : i32
    %1 = arith.extui %0 : i1 to i32
    %c0_i32_0 = arith.constant 0 : i32
    %2 = arith.cmpi ne, %1, %c0_i32_0 : i32
    scf.if %2 {
      %cst_17 = arith.constant 0.000000e+00 : f32
      %42 = vector.broadcast %cst_17 : f32 to vector<16x128xf32>
      %c0_18 = arith.constant 0 : index
      %c0_19 = arith.constant 0 : index
      %43 = vector.load %arg6[%c0_18, %c0_19] : memref<16x128xf32, #tpu.memory_space<vmem>>, vector<16x128xf32>
      tpu.vector_store %arg6[%c0_18, %c0_19], %42 {strides = array<i32>} : memref<16x128xf32, #tpu.memory_space<vmem>>, vector<16x128xf32>,
      %cst_20 = arith.constant 0.000000e+00 : f32
      %44 = vector.broadcast %cst_20 : f32 to vector<16x128xf32>
      %c0_21 = arith.constant 0 : index
      %c0_22 = arith.constant 0 : index
      %45 = vector.load %arg7[%c0_21, %c0_22] : memref<16x128xf32, #tpu.memory_space<vmem>>, vector<16x128xf32>
      tpu.vector_store %arg7[%c0_21, %c0_22], %44 {strides = array<i32>} : memref<16x128xf32, #tpu.memory_space<vmem>>, vector<16x128xf32>,
    } else {
    }
    %c0 = arith.constant 0 : index
    %c0_1 = arith.constant 0 : index
    %3 = vector.load %arg2[%c0, %c0_1] : memref<16x128xbf16, #tpu.memory_space<vmem>>, vector<16x128xbf16>
    %4 = arith.extf %3 : vector<16x128xbf16> to vector<16x128xf32>
    %c0_2 = arith.constant 0 : index
    %c0_3 = arith.constant 0 : index
    %5 = vector.load %arg3[%c0_2, %c0_3] : memref<16x128xi8, #tpu.memory_space<vmem>>, vector<16x128xi8>
    %6 = arith.sitofp %5 : vector<16x128xi8> to vector<16x128xf32>
    %7 = arith.negf %4 : vector<16x128xf32>
    %8 = math.exp %7 : vector<16x128xf32>
    %cst = arith.constant 1.000000e+00 : f32
    %9 = vector.broadcast %cst : f32 to vector<16x128xf32>
    %10 = arith.addf %9, %8 : vector<16x128xf32>
    %11 = arith.divf %9, %10 : vector<16x128xf32>
    %c1_i32 = arith.constant 1 : i32
    %12 = arith.muli %arg0, %c1_i32 : i32
    %13 = arith.addi %12, %arg1 : i32
    %14 = tpu.iota {dimensions = array<i32: 0>} : vector<16x128xi32>
    %15 = tpu.iota {dimensions = array<i32: 1>} : vector<16x128xi32>
    %c16_i32 = arith.constant 16 : i32
    %16 = arith.muli %13, %c16_i32 : i32
    %17 = vector.broadcast %16 : i32 to vector<16x128xi32>
    %18 = arith.addi %17, %14 : vector<16x128xi32>
    %c128_i32 = arith.constant 128 : i32
    %19 = vector.broadcast %c128_i32 : i32 to vector<16x128xi32>
    %20 = arith.muli %18, %19 : vector<16x128xi32>
    %21 = arith.addi %20, %15 : vector<16x128xi32>
    %c2000_i32 = arith.constant 2000 : i32
    %22 = vector.broadcast %c2000_i32 : i32 to vector<16x128xi32>
    %23 = arith.cmpi slt, %21, %22 : vector<16x128xi32>
    %cst_4 = arith.constant -1.000000e+00 : f32
    %24 = vector.broadcast %cst_4 : f32 to vector<16x128xf32>
    %25 = arith.cmpf one, %6, %24 : vector<16x128xf32>
    %26 = arith.andi %23, %25 : vector<16x128xi1>
    %c0_5 = arith.constant 0 : index
    %c0_6 = arith.constant 0 : index
    %27 = vector.load %arg6[%c0_5, %c0_6] : memref<16x128xf32, #tpu.memory_space<vmem>>, vector<16x128xf32>
    %28 = arith.minimumf %11, %6 : vector<16x128xf32>
    %cst_7 = arith.constant 0.000000e+00 : f32
    %29 = vector.broadcast %cst_7 : f32 to vector<16x128xf32>
    %30 = arith.select %26, %28, %29 : vector<16x128xi1>, vector<16x128xf32>
    %31 = arith.addf %27, %30 : vector<16x128xf32>
    %c0_8 = arith.constant 0 : index
    %c0_9 = arith.constant 0 : index
    %32 = vector.load %arg6[%c0_8, %c0_9] : memref<16x128xf32, #tpu.memory_space<vmem>>, vector<16x128xf32>
    tpu.vector_store %arg6[%c0_8, %c0_9], %31 {strides = array<i32>} : memref<16x128xf32, #tpu.memory_space<vmem>>, vector<16x128xf32>,
    %c0_10 = arith.constant 0 : index
    %c0_11 = arith.constant 0 : index
    %33 = vector.load %arg7[%c0_10, %c0_11] : memref<16x128xf32, #tpu.memory_space<vmem>>, vector<16x128xf32>
    %34 = arith.addf %11, %6 : vector<16x128xf32>
    %cst_12 = arith.constant 0.000000e+00 : f32
    %35 = vector.broadcast %cst_12 : f32 to vector<16x128xf32>
    %36 = arith.select %26, %34, %35 : vector<16x128xi1>, vector<16x128xf32>
    %37 = arith.addf %33, %36 : vector<16x128xf32>
    %c0_13 = arith.constant 0 : index
    %c0_14 = arith.constant 0 : index
    %38 = vector.load %arg7[%c0_13, %c0_14] : memref<16x128xf32, #tpu.memory_space<vmem>>, vector<16x128xf32>
    tpu.vector_store %arg7[%c0_13, %c0_14], %37 {strides = array<i32>} : memref<16x128xf32, #tpu.memory_space<vmem>>, vector<16x128xf32>,
    %c0_i32_15 = arith.constant 0 : i32
    %39 = arith.cmpi eq, %arg1, %c0_i32_15 : i32
    %40 = arith.extui %39 : i1 to i32
    %c0_i32_16 = arith.constant 0 : i32
    %41 = arith.cmpi ne, %40, %c0_i32_16 : i32
    scf.if %41 {
      %c0_17 = arith.constant 0 : index
      %c0_18 = arith.constant 0 : index
      %42 = vector.load %arg6[%c0_17, %c0_18] : memref<16x128xf32, #tpu.memory_space<vmem>>, vector<16x128xf32>
      %cst_19 = arith.constant dense<0.000000e+00> : vector<128xf32>
      %43 = vector.multi_reduction <add>, %42, %cst_19 [0] : vector<16x128xf32> to vector<128xf32>
      %44 = vector.shape_cast %43 : vector<128xf32> to vector<1x128xf32>
      %c0_20 = arith.constant 0 : index
      %c0_21 = arith.constant 0 : index
      %45 = vector.load %arg4[%c0_20, %c0_21] : memref<1x128xf32, #tpu.memory_space<vmem>>, vector<1x128xf32>
      tpu.vector_store %arg4[%c0_20, %c0_21], %44 {strides = array<i32>} : memref<1x128xf32, #tpu.memory_space<vmem>>, vector<1x128xf32>,
      %c0_22 = arith.constant 0 : index
      %c0_23 = arith.constant 0 : index
      %46 = vector.load %arg7[%c0_22, %c0_23] : memref<16x128xf32, #tpu.memory_space<vmem>>, vector<16x128xf32>
      %cst_24 = arith.constant dense<0.000000e+00> : vector<128xf32>
      %47 = vector.multi_reduction <add>, %46, %cst_24 [0] : vector<16x128xf32> to vector<128xf32>
      %48 = vector.shape_cast %47 : vector<128xf32> to vector<1x128xf32>
      %c0_25 = arith.constant 0 : index
      %c0_26 = arith.constant 0 : index
      %49 = vector.load %arg5[%c0_25, %c0_26] : memref<1x128xf32, #tpu.memory_space<vmem>>, vector<1x128xf32>
      tpu.vector_store %arg5[%c0_25, %c0_26], %48 {strides = array<i32>} : memref<1x128xf32, #tpu.memory_space<vmem>>, vector<1x128xf32>,
    } else {
    }
    return
  }
  func.func @transform_0(%arg0: i32, %arg1: i32) -> (i32, i32) {
    %c1_i32 = arith.constant 1 : i32
    %0 = arith.muli %arg0, %c1_i32 : i32
    %1 = arith.addi %0, %arg1 : i32
    %c0_i32 = arith.constant 0 : i32
    %2 = arith.minsi %1, %c0_i32 : i32
    %c0_i32_0 = arith.constant 0 : i32
    %c0_i32_1 = arith.constant 0 : i32
    return %2, %c0_i32_0 : i32, i32
  }
  func.func @transform_1(%arg0: i32, %arg1: i32) -> (i32, i32) {
    %c1_i32 = arith.constant 1 : i32
    %0 = arith.muli %arg0, %c1_i32 : i32
    %1 = arith.addi %0, %arg1 : i32
    %c0_i32 = arith.constant 0 : i32
    %2 = arith.minsi %1, %c0_i32 : i32
    %c0_i32_0 = arith.constant 0 : i32
    %c0_i32_1 = arith.constant 0 : i32
    return %2, %c0_i32_0 : i32, i32
  }
  func.func @transform_2(%arg0: i32, %arg1: i32) -> (i32, i32) {
    %c0_i32 = arith.constant 0 : i32
    %c0_i32_0 = arith.constant 0 : i32
    return %arg0, %c0_i32 : i32, i32
  }
  func.func @transform_3(%arg0: i32, %arg1: i32) -> (i32, i32) {
    %c0_i32 = arith.constant 0 : i32
    %c0_i32_0 = arith.constant 0 : i32
    return %arg0, %c0_i32 : i32, i32
  }
}

</mosaic_0001>

<llo_original>
// kernel: tpu_custom_call.1
$region0: #{tpu_custom_call.1}
  #allocation0 [shape = 'u32[]', space=smem, size = 0x4, offset = 0x4, fixed_abs, tag = 'smem constant byte address 0x4 - core index']
  #allocation1 [shape = 'u32[144,128]{1,0:T(1,128)}', space=vmem, size = 0x12000, scoped, tag = 'internal scratch']
  #allocation2 [shape = 'f32[16,128]{1,0:T(8,128)}', space=vmem, size = 0x2000, scoped, tag = 'scratch operand']
  #allocation3 [shape = 'f32[16,128]{1,0:T(8,128)}', space=vmem, size = 0x2000, scoped, tag = 'scratch operand']
  %s0 = inlined_call_operand.hbm [shape: bf16[16,128], index: 0, kind: input, shape index: {}]
  %s1 = inlined_call_operand.hbm [shape: s8[16,128], index: 1, kind: input, shape index: {}]
  %s2 = inlined_call_operand.hbm [shape: f32[1,128], index: 2, kind: output, shape index: {0}]
  %s3 = inlined_call_operand.hbm [shape: f32[1,128], index: 3, kind: output, shape index: {1}]
  %4 = xla_tuple %s2, %s3
  %s5 = sld [smem:[#allocation0]]
  $region42: #{tpu_custom_call.1} parent=0
    _
  %s7 = ssub.s32 1, %s5
  %s8 = scalar_select 0, %s7, %s5
  $region1: #{tpu_custom_call.1} parent=0
    #allocation4 [shape = 'u8[4096]{0}', space=vmem, size = 0x1000, scoped, tag = 'input window, operand 0, single buffered']
    #allocation5 [shape = 's32[1]{0}', space=sflag, size = 0x4, scoped, tag = 'scoped memory for tpu_custom_call.1']
    #allocation6 [shape = 's32[1]{0}', space=sflag, size = 0x4, scoped, tag = 'scoped memory for tpu_custom_call.1']
    #allocation7 [shape = 'u8[2048]{0}', space=vmem, size = 0x800, scoped, tag = 'input window, operand 1, single buffered']
    #allocation8 [shape = 's32[1]{0}', space=sflag, size = 0x4, scoped, tag = 'scoped memory for tpu_custom_call.1']
    #allocation9 [shape = 'u8[512]{0}', space=vmem, size = 0x400, scoped, tag = 'output window, operand 0, single buffered']
    #allocation10 [shape = 'u8[512]{0}', space=vmem, size = 0x400, scoped, tag = 'output window, operand 1, single buffered']
    #allocation11 [shape = 's32[1]{0}', space=sflag, size = 0x4, scoped, tag = 'scoped memory for tpu_custom_call.1']
    %9 = vsyncpa [#allocation5], 0
    %10 = vsyncpa [#allocation8], 0
    %11 = vsyncpa [#allocation6], 0
    %12 = vsyncpa [#allocation11], 0
    // Predicated region
    $region2: #{tpu_custom_call.1} parent=1 // pred_check
      _
    $region3: #{tpu_custom_call.1} parent=1 // pred_check_branch
      %14 = sbr.rel (0) target = $region5
    $region4: #{tpu_custom_call.1} parent=1 // pred_region
      %s15 = sadd.s32 0, 0
      %p16 = scmp.lt.s32.totalorder %s15, 0
      %s17 = scalar_select %p16, %s15, 0
      %s18 = smul.u32 2, %s17
      %s20 = ssub.s32 128, 128
      %21 = vsyncadd [#allocation5], %s20
      %s22 = smul.addr %s18, 64
      %s23 = scalar_lea.hbm %s0, %s22
      %s24 = sshll.u32 [#allocation4], 4
      %s25 = int_to_ptr.vmem [resolvable:$true] %s24
      %30 = dma.hbm_to_vmem [thread:$0]  %s23, 128, %s25, [#allocation5], 64, 64, 4
    $region5: #{tpu_custom_call.1} parent=1 // pred_fallthru
      _
    // Predicated region
    $region6: #{tpu_custom_call.1} parent=1 // pred_check
      _
    $region7: #{tpu_custom_call.1} parent=1 // pred_check_branch
      %32 = sbr.rel (0) target = $region9
    $region8: #{tpu_custom_call.1} parent=1 // pred_region
      %s33 = sadd.s32 0, 0
      %p34 = scmp.lt.s32.totalorder %s33, 0
      %s35 = scalar_select %p34, %s33, 0
      %s36 = smul.u32 2, %s35
      %s38 = ssub.s32 64, 64
      %39 = vsyncadd [#allocation8], %s38
      %s40 = smul.addr %s36, 32
      %s41 = scalar_lea.hbm %s1, %s40
      %s42 = sshll.u32 [#allocation7], 4
      %s43 = int_to_ptr.vmem [resolvable:$true] %s42
      %48 = dma.hbm_to_vmem [thread:$0]  %s41, 64, %s43, [#allocation8], 32, 32, 2
    $region9: #{tpu_custom_call.1} parent=1 // pred_fallthru
      _
    // Predicated region
    $region10: #{tpu_custom_call.1} parent=1 // pred_check
      _
    $region11: #{tpu_custom_call.1} parent=1 // pred_check_branch
      %50 = sbr.rel (0) target = $region13
    $region12: #{tpu_custom_call.1} parent=1 // pred_region
      %51 = dma.done [#allocation5], 128
    $region13: #{tpu_custom_call.1} parent=1 // pred_fallthru
      _
    // Predicated region
    $region14: #{tpu_custom_call.1} parent=1 // pred_check
      _
    $region15: #{tpu_custom_call.1} parent=1 // pred_check_branch
      %53 = sbr.rel (0) target = $region17
    $region16: #{tpu_custom_call.1} parent=1 // pred_region
      %54 = dma.done [#allocation8], 64
    $region17: #{tpu_custom_call.1} parent=1 // pred_fallthru
      _
    %s55 = sadd.s32 0, 0
    %p56 = scmp.lt.s32.totalorder %s55, 0
    %s57 = scalar_select %p56, %s55, 0
    %s58 = smul.u32 2, %s57
    %s59 = sadd.s32 0, 0
    %p60 = scmp.lt.s32.totalorder %s59, 0
    %s61 = scalar_select %p60, %s59, 0
    %s62 = smul.u32 2, %s61
    %p63 = scmp.eq.s32.totalorder 0, 0
    // Predicated region
    $region18: #{tpu_custom_call.1} parent=1 // pred_check
      %p64 = pneg %p63
    $region19: #{tpu_custom_call.1} parent=1 // pred_check_branch
      %66 = sbr.rel (%p64) target = $region21
    $region20: #{tpu_custom_call.1} parent=1 // pred_region
      %67 = vst [vmem:[#allocation2] sm:$0xff] 0.0
      %68 = vst [vmem:[#allocation2 + $0x8] sm:$0xff] 0.0
      %69 = vst [vmem:[#allocation3] sm:$0xff] 0.0
      %70 = vst [vmem:[#allocation3 + $0x8] sm:$0xff] 0.0
    $region21: #{tpu_custom_call.1} parent=1 // pred_fallthru
      _
    %v71 = vld [vmem:[#allocation4] sm:$0xf]
    %v72 = vld [vmem:[#allocation4 + $0x4] sm:$0xf]
    %v73 = vunpack.c.l.bf16 %v71
    %v74 = vunpack.c.l.bf16 %v72
    %v75 = vld [vmem:[#allocation7] sm:$0x3]
    %v76 = vld [vmem:[#allocation7 + $0x2] sm:$0x3]
    %v77 = vunpack.c.0.s8 %v75
    %v78 = vunpack.c.0.s8 %v76
    %v79 = vcvt.s32.f32 %v77
    %v80 = vcvt.s32.f32 %v78
    %v81 = vxor.u32 %v73, 2147483648
    %v82 = vxor.u32 %v74, 2147483648
    %v83 = vmul.f32 %v81, 1.442695
    %v84 = vpow.pop %v83
    %v85 = vmul.f32 %v82, 1.442695
    %v86 = vpow.pop %v85
    %v87 = vadd.f32 %v84, 1.0
    %v88 = vadd.f32 %v86, 1.0
    %v89 = vrcp.pop %v87
    %v90 = vmul.f32 1.0, %v89
    %v91 = vrcp.pop %v88
    %v92 = vmul.f32 1.0, %v91
    %s93 = sadd.s32 0, 0
    %v94 = vlaneseq
    %v95 = vshrl.u32 %v94, 7
    %v96 = vadd.s32 %v95, 8
    %v97 = vlaneseq
    %v98 = vand.u32 %v97, 127
    %s99 = smul.u32 %s93, 16
    %v100 = vstv %s99
    %v101 = vadd.s32 %v100, %v95
    %v102 = vadd.s32 %v100, %v96
    %v103 = vmul.u32 %v101, 128
    %v104 = vmul.u32 %v102, 128
    %v105 = vadd.s32 %v103, %v98
    %v106 = vadd.s32 %v104, %v98
    %vm107 = vcmp.lt.s32.totalorder %v105, 2000
    %vm108 = vcmp.lt.s32.totalorder %v106, 2000
    %vm109 = vcmp.ne.f32.partialorder %v79, -1.0
    %vm110 = vcmp.ne.f32.partialorder %v80, -1.0
    %vm111 = vmand %vm107, %vm109
    %vm112 = vmand %vm108, %vm110
    %v113 = vld [vmem:[#allocation2] sm:$0xff]
    %v114 = vld [vmem:[#allocation2 + $0x8] sm:$0xff]
    %v115 = vmin.f32 %v90, %v79
    %v116 = vmin.f32 %v92, %v80
    %v117 = vsel %vm111, %v115, 0.0
    %v118 = vsel %vm112, %v116, 0.0
    %v119 = vadd.f32 %v113, %v117
    %v120 = vadd.f32 %v114, %v118
    %121 = vst [vmem:[#allocation2] sm:$0xff] %v119
    %122 = vst [vmem:[#allocation2 + $0x8] sm:$0xff] %v120
    %v123 = vld [vmem:[#allocation3] sm:$0xff]
    %v124 = vld [vmem:[#allocation3 + $0x8] sm:$0xff]
    %v125 = vadd.f32 %v90, %v79
    %v126 = vadd.f32 %v92, %v80
    %v127 = vsel %vm111, %v125, 0.0
    %v128 = vsel %vm112, %v126, 0.0
    %v129 = vadd.f32 %v123, %v127
    %v130 = vadd.f32 %v124, %v128
    %131 = vst [vmem:[#allocation3] sm:$0xff] %v129
    %132 = vst [vmem:[#allocation3 + $0x8] sm:$0xff] %v130
    // Predicated region
    $region22: #{tpu_custom_call.1} parent=1 // pred_check
      %p133 = pneg %p63
    $region23: #{tpu_custom_call.1} parent=1 // pred_check_branch
      %135 = sbr.rel (%p133) target = $region25
    $region24: #{tpu_custom_call.1} parent=1 // pred_region
      %v136 = vld [vmem:[#allocation2] sm:$0xff]
      %v137 = vld [vmem:[#allocation2 + $0x8] sm:$0xff]
      %v138 = vadd.f32 %v136, %v137
      %v139 = vrot.slane %v138, 4
      %v140 = vadd.f32 %v138, %v139
      %v141 = vrot.slane %v140, 2
      %v142 = vadd.f32 %v140, %v141
      %v143 = vrot.slane %v142, 1
      %v144 = vadd.f32 %v142, %v143
      %145 = vst [vmem:[#allocation9] sm:$0x1] %v144
      %v146 = vld [vmem:[#allocation3] sm:$0xff]
      %v147 = vld [vmem:[#allocation3 + $0x8] sm:$0xff]
      %v148 = vadd.f32 %v146, %v147
      %v149 = vrot.slane %v148, 4
      %v150 = vadd.f32 %v148, %v149
      %v151 = vrot.slane %v150, 2
      %v152 = vadd.f32 %v150, %v151
      %v153 = vrot.slane %v152, 1
      %v154 = vadd.f32 %v152, %v153
      %155 = vst [vmem:[#allocation10] sm:$0x1] %v154
    $region25: #{tpu_custom_call.1} parent=1 // pred_fallthru
      _
    // Predicated region
    $region26: #{tpu_custom_call.1} parent=1 // pred_check
      _
    $region27: #{tpu_custom_call.1} parent=1 // pred_check_branch
      %157 = sbr.rel (0) target = $region29
    $region28: #{tpu_custom_call.1} parent=1 // pred_region
      %s159 = ssub.s32 16, 16
      %160 = vsyncadd [#allocation6], %s159
      %s162 = sshll.u32 [#allocation9], 4
      %s163 = int_to_ptr.vmem [resolvable:$true] %s162
      %165 = dma.vmem_to_hbm [thread:$0]  %s163, 16, %s2, [#allocation6]
    $region29: #{tpu_custom_call.1} parent=1 // pred_fallthru
      _
    // Predicated region
    $region30: #{tpu_custom_call.1} parent=1 // pred_check
      _
    $region31: #{tpu_custom_call.1} parent=1 // pred_check_branch
      %167 = sbr.rel (0) target = $region33
    $region32: #{tpu_custom_call.1} parent=1 // pred_region
      %s169 = ssub.s32 16, 16
      %170 = vsyncadd [#allocation11], %s169
      %s172 = sshll.u32 [#allocation10], 4
      %s173 = int_to_ptr.vmem [resolvable:$true] %s172
      %175 = dma.vmem_to_hbm [thread:$0]  %s173, 16, %s3, [#allocation11]
    $region33: #{tpu_custom_call.1} parent=1 // pred_fallthru
      _
    // Predicated region
    $region34: #{tpu_custom_call.1} parent=1 // pred_check
      _
    $region35: #{tpu_custom_call.1} parent=1 // pred_check_branch
      %177 = sbr.rel (0) target = $region37
    $region36: #{tpu_custom_call.1} parent=1 // pred_region
      %178 = dma.done [#allocation6], 16
    $region37: #{tpu_custom_call.1} parent=1 // pred_fallthru
      _
    // Predicated region
    $region38: #{tpu_custom_call.1} parent=1 // pred_check
      _
    $region39: #{tpu_custom_call.1} parent=1 // pred_check_branch
      %180 = sbr.rel (0) target = $region41
    $region40: #{tpu_custom_call.1} parent=1 // pred_region
      %181 = dma.done [#allocation11], 16
    $region41: #{tpu_custom_call.1} parent=1 // pred_fallthru
      _
    %182 = vsyncpa [#allocation5], 1
    %183 = vsyncpa [#allocation8], 1
    %184 = vsyncpa [#allocation6], 1
    %185 = vsyncpa [#allocation11], 1

</llo_original>
